<compile_context>
chip_gen: v7x
topology: tpu7x:2x2x1
jax: 0.10.0
libtpu: 0.0.40
codegen_flags: <defaults>
</compile_context>

<pallas_src>
import functools

import jax
import jax.numpy as jnp
from jax.experimental import pallas as pl
from jax.experimental.pallas import tpu as pltpu


def _round_up(n, m):
    return ((n + m - 1) // m) * m


def _center_loss_kernel(labels_ref, x_ref, c_hbm, out_ref,
                        gathered, sems, acc_ref, *, block_b, batch):
    # labels_ref: SMEM (B_pad,) int32     (scalar prefetch)
    # x_ref:      VMEM (block_b, D)       (auto-pipelined batch tile)
    # c_hbm:      ANY  (C, D)             (centers left in HBM)
    # out_ref:    SMEM (1, 1) float32     (scalar loss)
    # gathered:   VMEM (block_b, D)       scratch for gathered centers
    # sems:       DMA semaphores, one per gathered row
    # acc_ref:    SMEM (1,) float32       running sum over batch tiles
    i = pl.program_id(0)
    n_steps = pl.num_programs(0)
    base = i * block_b

    @pl.when(i == 0)
    def _():
        acc_ref[0] = jnp.float32(0.0)

    # Gather the labeled center row for every row of this batch tile.
    @pl.loop(0, block_b)
    def _(r):
        lbl = labels_ref[base + r]
        pltpu.make_async_copy(c_hbm.at[pl.ds(lbl, 1), :],
                              gathered.at[pl.ds(r, 1), :],
                              sems.at[r]).start()

    @pl.loop(0, block_b)
    def _(r):
        pltpu.make_async_copy(c_hbm.at[pl.ds(0, 1), :],
                              gathered.at[pl.ds(r, 1), :],
                              sems.at[r]).wait()

    x = x_ref[...].astype(jnp.float32)          # (block_b, D)
    c = gathered[...].astype(jnp.float32)       # (block_b, D)

    # Per-row expansion ||x||^2 + ||c||^2 - 2<x,c> (VPU + XLU row reduces),
    # clamped exactly like the PyTorch reference.
    d = (jnp.sum(x * x, axis=1, keepdims=True)
         + jnp.sum(c * c, axis=1, keepdims=True)
         - 2.0 * jnp.sum(x * c, axis=1, keepdims=True))      # (block_b, 1)
    d = jnp.clip(d, 1e-12, 1e12)

    # Zero out rows that are pure batch padding.
    rows = base + jax.lax.broadcasted_iota(jnp.int32, d.shape, 0)
    d = jnp.where(rows < batch, d, 0.0)

    acc_ref[0] = acc_ref[0] + jnp.sum(d)

    @pl.when(i == n_steps - 1)
    def _():
        out_ref[0, 0] = acc_ref[0] / jnp.float32(batch)


def center_loss(x, centers, labels, *, block_b=None):
    """x: (B, D), centers: (C, D), labels: (B,) int -> scalar float32 loss."""
    B, D = x.shape
    C, Dc = centers.shape
    assert D == Dc, (D, Dc)
    assert labels.shape == (B,)
    # TODO(synk): labels are assumed to lie in [0, C); out-of-range labels would
    # make the PyTorch boolean row-mask select zero elements (changing the mean
    # denominator), which has no clean Pallas equivalent here.

    if block_b is None:
        block_b = min(128, _round_up(B, 8))
    block_b = max(8, _round_up(block_b, 8))
    b_pad = _round_up(B, block_b)

    x_p = x
    labels_p = labels.astype(jnp.int32)
    if b_pad != B:
        x_p = jnp.pad(x, ((0, b_pad - B), (0, 0)))
        labels_p = jnp.pad(labels_p, (0, b_pad - B))

    n_tiles = b_pad // block_b
    c_itemsize = jnp.dtype(centers.dtype).itemsize
    x_itemsize = jnp.dtype(x.dtype).itemsize

    kernel = functools.partial(_center_loss_kernel, block_b=block_b, batch=B)

    out = pl.pallas_call(
        kernel,
        out_shape=jax.ShapeDtypeStruct((1, 1), jnp.float32),
        grid_spec=pltpu.PrefetchScalarGridSpec(
            num_scalar_prefetch=1,
            grid=(n_tiles,),
            in_specs=[
                pl.BlockSpec((block_b, D), lambda i, labels: (i, 0)),  # x tile
                pl.BlockSpec(memory_space=pl.ANY),                     # centers
            ],
            out_specs=pl.BlockSpec(memory_space=pltpu.MemorySpace.SMEM),
            scratch_shapes=[
                pltpu.VMEM((block_b, D), centers.dtype),
                pltpu.SemaphoreType.DMA((block_b,)),
                pltpu.SMEM((1,), jnp.float32),
            ],
        ),
        compiler_params=pltpu.CompilerParams(
            dimension_semantics=("arbitrary",),
        ),
        cost_estimate=pl.CostEstimate(
            flops=6 * b_pad * D,
            transcendentals=0,
            bytes_accessed=int(b_pad * D * (x_itemsize + c_itemsize)
                               + b_pad * 4 + 4),
        ),
    )(labels_p, x_p, centers)
    return out[0, 0]


def center_loss_ref(x, centers, labels):
    """Pure-JAX reference mirroring the PyTorch forward."""
    B = x.shape[0]
    C = centers.shape[0]
    distmat = (
        jnp.sum(x * x, axis=1, keepdims=True)
        + jnp.sum(centers * centers, axis=1, keepdims=True).T
        - 2.0 * x @ centers.T
    )
    mask = labels[:, None] == jnp.arange(C)[None, :]
    dist = jnp.where(mask, jnp.clip(distmat, 1e-12, 1e12), 0.0)
    return jnp.sum(dist) / B


if __name__ == "__main__":
    key = jax.random.PRNGKey(0)
    k1, k2, k3, k4, k5, k6 = jax.random.split(key, 6)

    # Case 1: batch is an exact tile (single grid step, no padding).
    x1 = jax.random.normal(k1, (8, 128), dtype=jnp.float32)
    c1 = jax.random.normal(k2, (16, 128), dtype=jnp.float32)
    l1 = jax.random.randint(k3, (8,), 0, 16, dtype=jnp.int32)
    loss1 = center_loss(x1, c1, l1)
    jax.block_until_ready(loss1)
    ref1 = center_loss_ref(x1, c1, l1)
    assert jnp.allclose(loss1, ref1, rtol=1e-5, atol=1e-5), (loss1, ref1)

    # Case 2: multi-step grid with batch padding (20 rows, 8-row tiles).
    x2 = jax.random.normal(k4, (20, 64), dtype=jnp.float32)
    c2 = jax.random.normal(k5, (24, 64), dtype=jnp.float32)
    l2 = jax.random.randint(k6, (20,), 0, 24, dtype=jnp.int32)
    loss2 = center_loss(x2, c2, l2, block_b=8)
    jax.block_until_ready(loss2)
    ref2 = center_loss_ref(x2, c2, l2)
    assert jnp.allclose(loss2, ref2, rtol=1e-5, atol=1e-5), (loss2, ref2)

    print("KERNEL_OK")
</pallas_src>

<mosaic_0001>
module attributes {stable_mosaic.version = 11 : i64} {
  func.func @_center_loss_kernel(%arg0: i32, %arg1: memref<8xi32, #tpu.memory_space<smem>>, %arg2: memref<8x128xf32, #tpu.memory_space<vmem>>, %arg3: memref<16x128xf32, #tpu.memory_space<any>>, %arg4: memref<1x1xf32, #tpu.memory_space<smem>>, %arg5: memref<8x128xf32, #tpu.memory_space<vmem>>, %arg6: memref<8x!tpu.dma_semaphore, #tpu.memory_space<semaphore_mem>>, %arg7: memref<1xf32, #tpu.memory_space<smem>>) attributes {dimension_semantics = [#tpu.dimension_semantics<arbitrary>], iteration_bounds = array<i64: 1>, scalar_prefetch = 1 : i64, scratch_operands = 3 : i64, tpu.core_type = #tpu.core_type<tc>, window_params = [{transform_indices = @transform_0, window_bounds = array<i64: 8, 128>}, {}, {transform_indices = @transform_2, window_bounds = array<i64: 1, 1>}]} {
    %c8_i32 = arith.constant 8 : i32
    %0 = arith.muli %arg0, %c8_i32 : i32
    %c0_i32 = arith.constant 0 : i32
    %1 = arith.cmpi eq, %arg0, %c0_i32 : i32
    %2 = arith.extui %1 : i1 to i32
    %c0_i32_0 = arith.constant 0 : i32
    %3 = arith.cmpi ne, %2, %c0_i32_0 : i32
    scf.if %3 {
      %cst_23 = arith.constant 0.000000e+00 : f32
      %c0_24 = arith.constant 0 : index
      %42 = memref.load %arg7[%c0_24] : memref<1xf32, #tpu.memory_space<smem>>
      memref.store %cst_23, %arg7[%c0_24] : memref<1xf32, #tpu.memory_space<smem>>
    } else {
    }
    %c0_i32_1 = arith.constant 0 : i32
    %c8_i32_2 = arith.constant 8 : i32
    %4 = arith.addi %c0_i32_1, %c8_i32_2 : i32
    %c1_i32 = arith.constant 1 : i32
    scf.for %arg8 = %c0_i32_1 to %4 step %c1_i32  : i32 {
      %c1_i32_23 = arith.constant 1 : i32
      %42 = arith.muli %arg8, %c1_i32_23 : i32
      %c0_i32_24 = arith.constant 0 : i32
      %43 = arith.addi %c0_i32_24, %42 : i32
      %44 = arith.addi %0, %43 : i32
      %45 = arith.index_cast %44 : i32 to index
      %46 = memref.load %arg1[%45] : memref<8xi32, #tpu.memory_space<smem>>
      %c0_i32_25 = arith.constant 0 : i32
      %47 = tpu.memref_slice %arg3[%46, %c0_i32_25] : memref<16x128xf32, #tpu.memory_space<any>> -> memref<1x128xf32, #tpu.memory_space<any>>
      %c0_i32_26 = arith.constant 0 : i32
      %48 = tpu.memref_slice %arg5[%43, %c0_i32_26] : memref<8x128xf32, #tpu.memory_space<vmem>> -> memref<1x128xf32, #tpu.memory_space<vmem>>
      %49 = tpu.memref_slice %arg6[%43] : memref<8x!tpu.dma_semaphore, #tpu.memory_space<semaphore_mem>> -> memref<1x!tpu.dma_semaphore, #tpu.memory_space<semaphore_mem>>
      %50 = tpu.memref_squeeze %49 : memref<1x!tpu.dma_semaphore, #tpu.memory_space<semaphore_mem>> -> memref<!tpu.dma_semaphore, #tpu.memory_space<semaphore_mem>>
      tpu.enqueue_dma source(%47 : memref<1x128xf32, #tpu.memory_space<any>>) target(%48 : memref<1x128xf32, #tpu.memory_space<vmem>>) target_semaphore(%50 : memref<!tpu.dma_semaphore, #tpu.memory_space<semaphore_mem>>)
    }
    %c8_i32_3 = arith.constant 8 : i32
    %c0_i32_4 = arith.constant 0 : i32
    %c8_i32_5 = arith.constant 8 : i32
    %5 = arith.addi %c0_i32_4, %c8_i32_5 : i32
    %c1_i32_6 = arith.constant 1 : i32
    scf.for %arg8 = %c0_i32_4 to %5 step %c1_i32_6  : i32 {
      %c1_i32_23 = arith.constant 1 : i32
      %42 = arith.muli %arg8, %c1_i32_23 : i32
      %c0_i32_24 = arith.constant 0 : i32
      %43 = arith.addi %c0_i32_24, %42 : i32
      %c0_i32_25 = arith.constant 0 : i32
      %c0_i32_26 = arith.constant 0 : i32
      %44 = tpu.memref_slice %arg3[%c0_i32_25, %c0_i32_26] : memref<16x128xf32, #tpu.memory_space<any>> -> memref<1x128xf32, #tpu.memory_space<any>>
      %c0_i32_27 = arith.constant 0 : i32
      %45 = tpu.memref_slice %arg5[%43, %c0_i32_27] : memref<8x128xf32, #tpu.memory_space<vmem>> -> memref<1x128xf32, #tpu.memory_space<vmem>>
      %46 = tpu.memref_slice %arg6[%43] : memref<8x!tpu.dma_semaphore, #tpu.memory_space<semaphore_mem>> -> memref<1x!tpu.dma_semaphore, #tpu.memory_space<semaphore_mem>>
      %47 = tpu.memref_squeeze %46 : memref<1x!tpu.dma_semaphore, #tpu.memory_space<semaphore_mem>> -> memref<!tpu.dma_semaphore, #tpu.memory_space<semaphore_mem>>
      tpu.wait_dma2 semaphore(%47 : memref<!tpu.dma_semaphore, #tpu.memory_space<semaphore_mem>>) src(%44 : memref<1x128xf32, #tpu.memory_space<any>>) dst(%45 : memref<1x128xf32, #tpu.memory_space<vmem>>)
    }
    %c8_i32_7 = arith.constant 8 : i32
    %c0 = arith.constant 0 : index
    %c0_8 = arith.constant 0 : index
    %6 = vector.load %arg2[%c0, %c0_8] : memref<8x128xf32, #tpu.memory_space<vmem>>, vector<8x128xf32>
    %c0_9 = arith.constant 0 : index
    %c0_10 = arith.constant 0 : index
    %7 = vector.load %arg5[%c0_9, %c0_10] : memref<8x128xf32, #tpu.memory_space<vmem>>, vector<8x128xf32>
    %8 = arith.mulf %6, %6 : vector<8x128xf32>
    %cst = arith.constant dense<0.000000e+00> : vector<8xf32>
    %9 = vector.multi_reduction <add>, %8, %cst [1] : vector<8x128xf32> to vector<8xf32>
    %10 = vector.shape_cast %9 : vector<8xf32> to vector<8x1xf32>
    %11 = arith.mulf %7, %7 : vector<8x128xf32>
    %cst_11 = arith.constant dense<0.000000e+00> : vector<8xf32>
    %12 = vector.multi_reduction <add>, %11, %cst_11 [1] : vector<8x128xf32> to vector<8xf32>
    %13 = vector.shape_cast %12 : vector<8xf32> to vector<8x1xf32>
    %14 = arith.addf %10, %13 : vector<8x1xf32>
    %15 = arith.mulf %6, %7 : vector<8x128xf32>
    %cst_12 = arith.constant dense<0.000000e+00> : vector<8xf32>
    %16 = vector.multi_reduction <add>, %15, %cst_12 [1] : vector<8x128xf32> to vector<8xf32>
    %17 = vector.shape_cast %16 : vector<8xf32> to vector<8x1xf32>
    %cst_13 = arith.constant 2.000000e+00 : f32
    %18 = vector.broadcast %cst_13 : f32 to vector<8x1xf32>
    %19 = arith.mulf %18, %17 : vector<8x1xf32>
    %20 = arith.subf %14, %19 : vector<8x1xf32>
    %cst_14 = arith.constant 9.99999996E-13 : f32
    %cst_15 = arith.constant 9.99999995E+11 : f32
    %21 = vector.broadcast %cst_14 : f32 to vector<8x1xf32>
    %22 = arith.maximumf %21, %20 : vector<8x1xf32>
    %23 = vector.broadcast %cst_15 : f32 to vector<8x1xf32>
    %24 = arith.minimumf %23, %22 : vector<8x1xf32>
    %25 = tpu.iota {dimensions = array<i32: 0>} : vector<8x1xi32>
    %26 = vector.broadcast %0 : i32 to vector<8x1xi32>
    %27 = arith.addi %26, %25 : vector<8x1xi32>
    %c8_i32_16 = arith.constant 8 : i32
    %28 = vector.broadcast %c8_i32_16 : i32 to vector<8x1xi32>
    %29 = arith.cmpi slt, %27, %28 : vector<8x1xi32>
    %cst_17 = arith.constant 0.000000e+00 : f32
    %30 = vector.broadcast %cst_17 : f32 to vector<8x1xf32>
    %31 = arith.select %29, %24, %30 : vector<8x1xi1>, vector<8x1xf32>
    %c0_18 = arith.constant 0 : index
    %32 = memref.load %arg7[%c0_18] : memref<1xf32, #tpu.memory_space<smem>>
    %33 = vector.shape_cast %31 : vector<8x1xf32> to vector<1x8x1xf32>
    %cst_19 = arith.constant dense<0.000000e+00> : vector<1xf32>
    %34 = vector.multi_reduction <add>, %33, %cst_19 [1, 2] : vector<1x8x1xf32> to vector<1xf32>
    %35 = vector.shape_cast %34 : vector<1xf32> to vector<1x1x1xf32>
    %36 = vector.extract %35[0, 0, 0] : f32 from vector<1x1x1xf32>
    %37 = arith.addf %32, %36 : f32
    %c0_20 = arith.constant 0 : index
    %38 = memref.load %arg7[%c0_20] : memref<1xf32, #tpu.memory_space<smem>>
    memref.store %37, %arg7[%c0_20] : memref<1xf32, #tpu.memory_space<smem>>
    %c0_i32_21 = arith.constant 0 : i32
    %39 = arith.cmpi eq, %arg0, %c0_i32_21 : i32
    %40 = arith.extui %39 : i1 to i32
    %c0_i32_22 = arith.constant 0 : i32
    %41 = arith.cmpi ne, %40, %c0_i32_22 : i32
    scf.if %41 {
      %c0_23 = arith.constant 0 : index
      %42 = memref.load %arg7[%c0_23] : memref<1xf32, #tpu.memory_space<smem>>
      %cst_24 = arith.constant 8.000000e+00 : f32
      %43 = arith.divf %42, %cst_24 : f32
      %c0_25 = arith.constant 0 : index
      %c0_26 = arith.constant 0 : index
      %44 = memref.load %arg4[%c0_25, %c0_26] : memref<1x1xf32, #tpu.memory_space<smem>>
      memref.store %43, %arg4[%c0_25, %c0_26] : memref<1x1xf32, #tpu.memory_space<smem>>
    } else {
    }
    return
  }
  func.func @transform_0(%arg0: i32, %arg1: memref<8xi32, #tpu.memory_space<smem>>) -> (i32, i32) {
    %c0_i32 = arith.constant 0 : i32
    %c0_i32_0 = arith.constant 0 : i32
    return %arg0, %c0_i32 : i32, i32
  }
  func.func @transform_2(%arg0: i32, %arg1: memref<8xi32, #tpu.memory_space<smem>>) -> (i32, i32) {
    %c0_i32 = arith.constant 0 : i32
    %c0_i32_0 = arith.constant 0 : i32
    %c0_i32_1 = arith.constant 0 : i32
    return %c0_i32, %c0_i32_0 : i32, i32
  }
}

</mosaic_0001>

<llo_original>
// kernel: tpu_custom_call.1
$region0: #{tpu_custom_call.1}
  #allocation0 [shape = 'u32[]', space=smem, size = 0x4, offset = 0x4, fixed_abs, tag = 'smem constant byte address 0x4 - core index']
  #allocation1 [shape = 'u32[144,128]{1,0:T(1,128)}', space=vmem, size = 0x12000, scoped, tag = 'internal scratch']
  #allocation2 [shape = 'f32[8,128]{1,0:T(8,128)}', space=vmem, size = 0x1000, scoped, tag = 'scratch operand']
  #allocation3 [shape = 's32[8]{0}', space=sflag, size = 0x20, scoped, tag = 'scratch operand']
  #allocation4 [shape = 'f32[1]{0:T(128)}', space=smem, size = 0x200, scoped, tag = 'scratch operand']
  #allocation5 [shape = 's32[1]{0}', space=sflag, size = 0x4, scoped, tag = 'scoped memory for tpu_custom_call.1']
  #allocation6 [shape = 'u8[512]{0}', space=smem, size = 0x200, scoped, tag = 'prefetched SMEM operand 0']
  #allocation11 [shape = 's32[]', space=sflag, size = 0x4, offset = 0, fixed_abs, tag = 'sflag constant byte address 0x0 - dummy sync flag']
  #allocation12 [shape = 's32[]', space=sflag, size = 0x4, offset = 0, fixed_abs, tag = 'sflag constant byte address 0x0 - dummy sync flag']
  #allocation13 [shape = 'u32[]', space=smem, size = 0x4, offset = 0x44, fixed_abs, tag = 'smem constant byte address 0x44 - assertion arg 0']
  #allocation14 [shape = 'u32[]', space=smem, size = 0x4, offset = 0x48, fixed_abs, tag = 'smem constant byte address 0x48 - assertion arg 1']
  %s0 = inlined_call_operand.hbm [shape: s32[8], index: 0, kind: input, shape index: {}]
  %s1 = inlined_call_operand.hbm [shape: f32[8,128], index: 1, kind: input, shape index: {}]
  %s2 = inlined_call_operand.hbm [shape: f32[16,128], index: 2, kind: input, shape index: {}]
  %s3 = inlined_call_operand.hbm [shape: f32[1,1], index: 3, kind: output, shape index: {}]
  %s4 = sld [smem:[#allocation0]]
  $region44: #{tpu_custom_call.1} parent=0
    _
  %s6 = ssub.s32 1, %s4
  %s7 = scalar_select 0, %s6, %s4
  %9 = dma.hbm_to_smem %s0, 16, [#allocation6], [#allocation5]
  %10 = dma.done [#allocation5], 16
  %11 = sfence
  $region1: #{tpu_custom_call.1} parent=0
    #allocation7 [shape = 'u8[4096]{0}', space=vmem, size = 0x1000, scoped, tag = 'input window, operand 1, single buffered']
    #allocation8 [shape = 's32[1]{0}', space=sflag, size = 0x4, scoped, tag = 'scoped memory for tpu_custom_call.1']
    #allocation9 [shape = 's32[1]{0}', space=sflag, size = 0x4, scoped, tag = 'scoped memory for tpu_custom_call.1']
    #allocation10 [shape = 'u8[512]{0}', space=smem, size = 0x200, scoped, tag = 'output window, operand 0, single buffered']
    %12 = vsyncpa [#allocation8], 0
    %13 = vsyncpa [#allocation9], 0
    // Predicated region
    $region2: #{tpu_custom_call.1} parent=1 // pred_check
      _
    $region3: #{tpu_custom_call.1} parent=1 // pred_check_branch
      %15 = sbr.rel (0) target = $region5
    $region4: #{tpu_custom_call.1} parent=1 // pred_region
      %s17 = ssub.s32 128, 128
      %18 = vsyncadd [#allocation8], %s17
      %s20 = sshll.u32 [#allocation7], 4
      %s21 = int_to_ptr.vmem [resolvable:$true] %s20
      %23 = dma.hbm_to_vmem [thread:$0]  %s1, 128, %s21, [#allocation8]
    $region5: #{tpu_custom_call.1} parent=1 // pred_fallthru
      _
    // Predicated region
    $region6: #{tpu_custom_call.1} parent=1 // pred_check
      _
    $region7: #{tpu_custom_call.1} parent=1 // pred_check_branch
      %25 = sbr.rel (0) target = $region9
    $region8: #{tpu_custom_call.1} parent=1 // pred_region
      %26 = dma.done [#allocation8], 128
    $region9: #{tpu_custom_call.1} parent=1 // pred_fallthru
      _
    %s27 = smul.u32 0, 8
    %p28 = scmp.eq.s32.totalorder 0, 0
    // Predicated region
    $region10: #{tpu_custom_call.1} parent=1 // pred_check
      %p29 = pneg %p28
    $region11: #{tpu_custom_call.1} parent=1 // pred_check_branch
      %31 = sbr.rel (%p29) target = $region13
    $region12: #{tpu_custom_call.1} parent=1 // pred_region
      %s32 = scalar_lea.smem [#allocation4], 0
      %33 = sst [smem:[%s32]] 0.0
    $region13: #{tpu_custom_call.1} parent=1 // pred_fallthru
      _
    loop: start=0, step=1, limit=8
    $region14: #{tpu_custom_call.1} parent=1 // loop_pre_header
      _
    $region15: #{tpu_custom_call.1} parent=1 // loop_header
      %s35 = sphi 0, %s39
      %p36 = scmp.ge.s32.totalorder %s35, 8
    $region16: #{tpu_custom_call.1} parent=1 // loop_header_branch
      %38 = sbr.rel (%p36) target = $region20
    $region17: #{tpu_custom_call.1} parent=1 // loop_body
      %s40 = sadd.s32 %s27, %s35
      %s41 = sld [smem:[#allocation6 + %s40]]
      %s42 = smul.addr %s41, 16
      %s43 = scalar_lea.hbm %s2, %s42
      %s44 = scalar_lea.vmem [#allocation2], %s35
      %s45 = scalar_lea.sflag [#allocation3], %s35
      // Predicated region
      $region21: #{tpu_custom_call.1} parent=17 // pred_check
        _
      $region22: #{tpu_custom_call.1} parent=17 // pred_check_branch
        %47 = sbr.rel target = $region24
      $region23: #{tpu_custom_call.1} parent=17 // pred_region
        %48 = sst [smem:[#allocation13]] [#allocation12]
        %49 = sst [smem:[#allocation14]] [#allocation11]
      $region24: #{tpu_custom_call.1} parent=17 // pred_fallthru
        _
      %51 = shalt.err (0)
      %s53 = sshll.u32 %s44, 4
      %s54 = int_to_ptr.vmem [resolvable:$true] %s53
      %56 = dma.hbm_to_vmem [thread:$0]  %s43, 16, %s54, %s45
    $region18: #{tpu_custom_call.1} parent=1 // loop_footer
      %s39 = sadd.s32 1, %s35
    $region19: #{tpu_custom_call.1} parent=1 // loop_footer_branch
      %34 = sbr.rel target = $region15
    $region20: #{tpu_custom_call.1} parent=1 // loop_exit
      _
    loop: start=0, step=1, limit=8
    $region25: #{tpu_custom_call.1} parent=1 // loop_pre_header
      _
    $region26: #{tpu_custom_call.1} parent=1 // loop_header
      %s58 = sphi 0, %s62
      %p59 = scmp.ge.s32.totalorder %s58, 8
    $region27: #{tpu_custom_call.1} parent=1 // loop_header_branch
      %61 = sbr.rel (%p59) target = $region31
    $region28: #{tpu_custom_call.1} parent=1 // loop_body
      %s63 = scalar_lea.sflag [#allocation3], %s58
      %s64 = smul.u32 1, 1
      %s65 = sshll.u32 %s64, 4
      %66 = dma.done %s63, %s65
    $region29: #{tpu_custom_call.1} parent=1 // loop_footer
      %s62 = sadd.s32 1, %s58
    $region30: #{tpu_custom_call.1} parent=1 // loop_footer_branch
      %57 = sbr.rel target = $region26
    $region31: #{tpu_custom_call.1} parent=1 // loop_exit
      _
    %v67 = vld [vmem:[#allocation7] sm:$0xff]
    %v68 = vld [vmem:[#allocation2] sm:$0xff]
    %v69 = vmul.f32 %v67, %v67
    %70 = vadd.xlane.f32.xlu0 %v69
    %v71 = vpop.xlane.xlu0 %70
    %v72 = vmul.f32 %v68, %v68
    %73 = vadd.xlane.f32.xlu0 %v72
    %v74 = vpop.xlane.xlu0 %73
    %v75 = vadd.f32 %v71, %v74
    %v76 = vmul.f32 %v67, %v68
    %77 = vadd.xlane.f32.xlu0 %v76
    %v78 = vpop.xlane.xlu0 %77
    %v79 = vmul.f32 %v78, 2.0
    %v80 = vsub.f32 %v75, %v79
    %v81 = vmax.f32 %v80, 1e-12
    %v82 = vmin.f32 %v81, 1e+12
    %v83 = vlaneseq
    %v84 = vshrl.u32 %v83, 7
    %v85 = vstv %s27
    %v86 = vadd.s32 %v85, %v84
    %vm87 = vcmp.lt.s32.totalorder %v86, 8
    %v88 = vsel %vm87, %v82, 0.0
    %s89 = sld [smem:[#allocation4]]
    %vm90 = vcmask 7168
    %v91 = vsel %vm90, %v88, 0.0
    %92 = vadd.xlane.f32.xlu0 %v91
    %v93 = vpop.xlane.xlu0 %92
    %v94 = vrot.slane %v93, 4
    %v95 = vadd.f32 %v93, %v94
    %v96 = vrot.slane %v95, 2
    %v97 = vadd.f32 %v95, %v96
    %v98 = vrot.slane %v97, 1
    %v99 = vadd.f32 %v97, %v98
    %s100 = vtos %v99
    %s101 = sadd.f32 %s89, %s100
    %s102 = scalar_lea.smem [#allocation4], 0
    %103 = sst [smem:[%s102]] %s101
    // Predicated region
    $region32: #{tpu_custom_call.1} parent=1 // pred_check
      %p104 = pneg %p28
    $region33: #{tpu_custom_call.1} parent=1 // pred_check_branch
      %106 = sbr.rel (%p104) target = $region35
    $region34: #{tpu_custom_call.1} parent=1 // pred_region
      %s107 = sld [smem:[#allocation4]]
      %v108 = vrcp.pop 8.0
      %s109 = vtos %v108
      %s110 = smul.f32 %s107, %s109
      %s111 = scalar_lea.smem [#allocation10], 0
      %112 = sst [smem:[%s111]] %s110
    $region35: #{tpu_custom_call.1} parent=1 // pred_fallthru
      _
    // Predicated region
    $region36: #{tpu_custom_call.1} parent=1 // pred_check
      _
    $region37: #{tpu_custom_call.1} parent=1 // pred_check_branch
      %114 = sbr.rel (0) target = $region39
    $region38: #{tpu_custom_call.1} parent=1 // pred_region
      %s116 = ssub.s32 16, 16
      %117 = vsyncadd [#allocation9], %s116
      %120 = dma.smem_to_hbm [#allocation10], 16, %s3, [#allocation9]
    $region39: #{tpu_custom_call.1} parent=1 // pred_fallthru
      _
    // Predicated region
    $region40: #{tpu_custom_call.1} parent=1 // pred_check
      _
    $region41: #{tpu_custom_call.1} parent=1 // pred_check_branch
      %122 = sbr.rel (0) target = $region43
    $region42: #{tpu_custom_call.1} parent=1 // pred_region
      %123 = dma.done [#allocation9], 16
    $region43: #{tpu_custom_call.1} parent=1 // pred_fallthru
      _
    %124 = sfence
    %125 = vsyncpa [#allocation8], 1
    %126 = vsyncpa [#allocation9], 1
  %127 = vsyncmov [#allocation3]
  %s128 = vpop.sfrf %127
  %p129 = scmp.eq.s32.totalorder %s128, 0
  %p130 = pneg %p129
  %132 = shalt.err (%p130)
  %s133 = scalar_lea.sflag [#allocation3], 1
  %134 = vsyncmov %s133
  %s135 = vpop.sfrf %134
  %p136 = scmp.eq.s32.totalorder %s135, 0
  %p137 = pneg %p136
  %139 = shalt.err (%p137)
  %s140 = scalar_lea.sflag [#allocation3], 2
  %141 = vsyncmov %s140
  %s142 = vpop.sfrf %141
  %p143 = scmp.eq.s32.totalorder %s142, 0
  %p144 = pneg %p143
  %146 = shalt.err (%p144)
  %s147 = scalar_lea.sflag [#allocation3], 3
  %148 = vsyncmov %s147
  %s149 = vpop.sfrf %148
  %p150 = scmp.eq.s32.totalorder %s149, 0
  %p151 = pneg %p150
  %153 = shalt.err (%p151)
  %s154 = scalar_lea.sflag [#allocation3], 4
  %155 = vsyncmov %s154
  %s156 = vpop.sfrf %155
  %p157 = scmp.eq.s32.totalorder %s156, 0
  %p158 = pneg %p157
  %160 = shalt.err (%p158)
  %s161 = scalar_lea.sflag [#allocation3], 5
  %162 = vsyncmov %s161
  %s163 = vpop.sfrf %162
  %p164 = scmp.eq.s32.totalorder %s163, 0
  %p165 = pneg %p164
  %167 = shalt.err (%p165)
  %s168 = scalar_lea.sflag [#allocation3], 6
  %169 = vsyncmov %s168
  %s170 = vpop.sfrf %169
  %p171 = scmp.eq.s32.totalorder %s170, 0
  %p172 = pneg %p171
  %174 = shalt.err (%p172)
  %s175 = scalar_lea.sflag [#allocation3], 7
  %176 = vsyncmov %s175
  %s177 = vpop.sfrf %176
  %p178 = scmp.eq.s32.totalorder %s177, 0
  %p179 = pneg %p178
  %181 = shalt.err (%p179)

</llo_original>
